<compile_context>
chip_gen: v5e
topology: v5e:2x2
jax: 0.10.0
libtpu: 0.0.40
codegen_flags: <defaults>
</compile_context>

<pallas_src>
import numpy as np
import jax
import jax.numpy as jnp
from jax import lax
from jax.experimental import pallas as pl
from jax.experimental.pallas import tpu as pltpu


def _pick_row_tile(n):
    for tm in (512, 256, 128, 64, 32, 16, 8):
        if n % tm == 0:
            return tm
    return n


def _make_kernel(N, U, B, TM, weight, temperature):
    w0, w1, w2 = (float(w) for w in weight)
    inv_t = 1.0 / float(temperature)
    n_tiles = N // TM
    inv_n = 1.0 / float(N)
    inv_n2 = 1.0 / float(N * N)
    dn = (((1,), (1,)), ((), ()))  # contract last dims: A @ B.T without a transpose copy

    def kernel(st_ref, car_ref, plate_ref,
               cst_ref, ccar_ref, cplate_ref,
               conc_ref, lbl_ref,
               out_ref,
               nst, ncar, nplate, pos_col, neg_row, proto_acc):
        t = pl.program_id(0)
        r0 = t * TM

        # ---- step 0: L2-normalize full features into resident scratch, zero accumulators ----
        @pl.when(t == 0)
        def _init():
            def l2n(x):  # == x / max(||x||_2, 1e-12)
                ss = jnp.sum(x * x, axis=-1, keepdims=True)
                return x * lax.rsqrt(jnp.maximum(ss, 1e-24))
            nst[...] = l2n(st_ref[...])
            ncar[...] = l2n(car_ref[...])
            nplate[...] = l2n(plate_ref[...])
            neg_row[...] = jnp.zeros_like(neg_row)
            proto_acc[...] = jnp.zeros_like(proto_acc)

        xs = nst[pl.ds(r0, TM), :]
        xc = ncar[pl.ds(r0, TM), :]
        xp = nplate[pl.ds(r0, TM), :]

        # ---------- contrastive: weighted similarity of this row tile vs all rows ----------
        num = jnp.zeros((TM, N), jnp.float32)
        den = jnp.zeros((TM, N), jnp.float32)
        for rows, full_ref, w in ((xs, nst, w0), (xc, ncar, w1), (xp, nplate, w2)):
            s = lax.dot_general(rows, full_ref[...], dn,
                                preferred_element_type=jnp.float32)       # [TM, N]
            wm = jnp.where(s == 0.0, 0.0, w)                              # weights[sim == 0] = 0
            num = num + s * wm
            den = den + wm
        wsim = num * pl.reciprocal(den + 1e-12, approx=True)
        e = jnp.exp(wsim * inv_t)

        rid = r0 + lax.broadcasted_iota(jnp.int32, (TM, N), 0)
        cid = lax.broadcasted_iota(jnp.int32, (TM, N), 1)
        diff = jnp.abs(rid - cid)
        pos_m = diff == B
        neg_m = jnp.logical_and(diff != 0, diff != B)

        pos_col[pl.ds(r0, TM), :] = jnp.sum(jnp.where(pos_m, e, 0.0),
                                            axis=1, keepdims=True)        # [TM, 1]
        # e and neg_m are symmetric, so accumulating column sums over the row tiles
        # reproduces the reference's per-row negative sums, laid out lane-dense [1, N].
        neg_row[...] += jnp.sum(jnp.where(neg_m, e, 0.0), axis=0, keepdims=True)

        # ---------- prototypical: dense MXU matmul against de-duplicated centroids ----------
        conc = conc_ref[...]                                               # [3, U]
        lp_num = jnp.zeros((TM, U), jnp.float32)
        lp_den = jnp.zeros((TM, U), jnp.float32)
        for m, (rows, cref, w) in enumerate(((xs, cst_ref, w0),
                                             (xc, ccar_ref, w1),
                                             (xp, cplate_ref, w2))):
            raw = lax.dot_general(rows, cref[...], dn,
                                  preferred_element_type=jnp.float32)      # [TM, U]
            cm = conc[m:m + 1, :]                                          # [1, U]
            lg = raw * pl.reciprocal(cm + 1e-12, approx=True)
            wm = jnp.where(jnp.logical_or(cm == 0.0, lg == 0.0), 0.0, w)
            lp_num = lp_num + lg * wm
            lp_den = lp_den + wm
        logits = lp_num * pl.reciprocal(lp_den + 1e-12, approx=True)        # [TM, U]

        # cross-entropy with target == the row's own label (class 0 in the reference
        # ordering); logsumexp is order invariant so the canonical ordering is exact.
        lbl = lbl_ref[pl.ds(r0, TM), :]                                     # [TM, 1] int32
        onehot = lax.broadcasted_iota(jnp.int32, (TM, U), 1) == lbl
        tgt = jnp.sum(jnp.where(onehot, logits, 0.0), axis=1, keepdims=True)
        mmax = jnp.max(logits, axis=1, keepdims=True)
        lse = mmax + jnp.log(jnp.sum(jnp.exp(logits - mmax), axis=1, keepdims=True))
        proto_acc[...] += jnp.sum(lse - tgt, axis=0, keepdims=True)

        # ---------- finalize on the last row tile ----------
        @pl.when(t == n_tiles - 1)
        def _fin():
            neg = neg_row[...]                                              # [1, N]
            if n_tiles == 1:
                cross = jnp.sum(jnp.log(pos_col[...] + neg), keepdims=True)
            else:
                def chunk(c, acc):                                          # bound temps to [TM, N]
                    pc = pos_col[pl.ds(c * TM, TM), :]
                    return acc + jnp.sum(jnp.log(pc + neg), keepdims=True)
                cross = lax.fori_loop(0, n_tiles, chunk,
                                      jnp.zeros((1, 1), jnp.float32))
            sum_log_pos = jnp.sum(jnp.log(pos_col[...]), keepdims=True)
            # reference: mean over the broadcasted [N, N] tensor of
            #   log(pos_i + neg_j) - log(pos_i)
            loss_c = cross * inv_n2 - sum_log_pos * inv_n
            loss_p = proto_acc[...] * inv_n
            out_ref[...] = loss_c + loss_p

    return kernel


def multimodal_prototypical_loss(st_i, st_j, car_i, car_j, plate_i, plate_j,
                                 gt_labels, cluster_centroids, cluster_concentration,
                                 weight, temperature):
    B = int(st_i.shape[0])
    N = 2 * B
    D = int(st_i.shape[1])

    st = jnp.concatenate([st_i, st_j], axis=0).astype(jnp.float32)
    car = jnp.concatenate([car_i, car_j], axis=0).astype(jnp.float32)
    plate = jnp.concatenate([plate_i, plate_j], axis=0).astype(jnp.float32)

    # -- de-duplicated prototype set (host side; data-dependent shapes) --
    labels = np.asarray(gt_labels).reshape(-1)
    gt_set = np.unique(labels)
    U = int(gt_set.shape[0])
    label_idx = jnp.asarray(np.searchsorted(gt_set, labels).astype(np.int32).reshape(N, 1))
    gt_set_j = jnp.asarray(gt_set.astype(np.int32))

    cen_st, cen_car, cen_plate = cluster_centroids
    cst = jnp.take(jnp.asarray(cen_st, jnp.float32), gt_set_j, axis=0)       # [U, D]
    ccar = jnp.take(jnp.asarray(cen_car, jnp.float32), gt_set_j, axis=0)
    cplate = jnp.take(jnp.asarray(cen_plate, jnp.float32), gt_set_j, axis=0)
    conc = jnp.stack([jnp.asarray(c, jnp.float32) for c in cluster_concentration], axis=0)
    conc_sel = jnp.take(conc, gt_set_j, axis=1)                               # [3, U]

    # -- pad the contraction dim to a multiple of 128 (exact: zero columns change
    #    neither the dot products nor the L2 norms) for full MXU depth --
    D_pad = ((D + 127) // 128) * 128
    if D_pad != D:
        padw = ((0, 0), (0, D_pad - D))
        st, car, plate = (jnp.pad(st, padw), jnp.pad(car, padw), jnp.pad(plate, padw))
        cst, ccar, cplate = (jnp.pad(cst, padw), jnp.pad(ccar, padw), jnp.pad(cplate, padw))

    TM = _pick_row_tile(N)
    n_tiles = N // TM
    kern = _make_kernel(N, U, B, TM, weight, temperature)

    def resident(shape):  # one block == whole array, fetched once, stays in VMEM
        return pl.BlockSpec(shape, lambda *_: (0,) * len(shape))

    flops = 3 * 2 * N * N * D_pad + 3 * 2 * N * U * D_pad
    transcendentals = 2 * N * N + 4 * N * U + 4 * N
    bytes_accessed = 4 * (3 * N * D_pad + 3 * U * D_pad + 3 * U + N + 1)
    est_vmem = 4 * (8 * N * D_pad + 4 * U * D_pad + 12 * TM * N
                    + 4 * TM * D_pad + 10 * TM * U + 8 * N) + (2 << 20)
    vmem_limit = int(min(max(est_vmem, 16 << 20), 64 << 20))

    loss = pl.pallas_call(
        kern,
        out_shape=jax.ShapeDtypeStruct((1, 1), jnp.float32),
        grid=(n_tiles,),
        in_specs=[resident((N, D_pad)), resident((N, D_pad)), resident((N, D_pad)),
                  resident((U, D_pad)), resident((U, D_pad)), resident((U, D_pad)),
                  resident((3, U)), resident((N, 1))],
        out_specs=resident((1, 1)),
        scratch_shapes=[pltpu.VMEM((N, D_pad), jnp.float32),
                        pltpu.VMEM((N, D_pad), jnp.float32),
                        pltpu.VMEM((N, D_pad), jnp.float32),
                        pltpu.VMEM((N, 1), jnp.float32),
                        pltpu.VMEM((1, N), jnp.float32),
                        pltpu.VMEM((1, 1), jnp.float32)],
        compiler_params=pltpu.CompilerParams(
            dimension_semantics=("arbitrary",),          # scratch accumulates across row tiles
            vmem_limit_bytes=vmem_limit),
        cost_estimate=pl.CostEstimate(flops=flops,
                                      transcendentals=transcendentals,
                                      bytes_accessed=bytes_accessed),
    )(st, car, plate, cst, ccar, cplate, conc_sel, label_idx)
    return loss[0, 0]


def _reference_loss(st_i, st_j, car_i, car_j, plate_i, plate_j,
                    gt_labels, cluster_centroids, cluster_concentration,
                    weight, temperature):
    # straight jnp port of the torch module (for a tolerance check only)
    def l2n(x):
        n = jnp.sqrt(jnp.sum(x * x, axis=-1, keepdims=True))
        return x / jnp.maximum(n, 1e-12)

    B = st_i.shape[0]
    N = 2 * B
    st = jnp.concatenate([l2n(st_i), l2n(st_j)], 0)
    car = jnp.concatenate([l2n(car_i), l2n(car_j)], 0)
    plate = jnp.concatenate([l2n(plate_i), l2n(plate_j)], 0)

    sims = jnp.stack([st @ st.T, car @ car.T, plate @ plate.T], 0)
    w = jnp.asarray(weight, jnp.float32)[:, None, None] * jnp.ones_like(sims)
    w = jnp.where(sims == 0.0, 0.0, w)
    wsim = jnp.sum(sims * w, 0) / (jnp.sum(w, 0) + 1e-12)
    e = jnp.exp(wsim / temperature)

    eye = np.eye(N, dtype=bool)
    pair = np.zeros((N, N), dtype=bool)
    idx = np.arange(B)
    pair[idx, B + idx] = True
    pair[B + idx, idx] = True
    pos = e[jnp.asarray(pair)].reshape(N, 1)
    neg = e[jnp.asarray((~eye) & (~pair))].reshape(N, -1).sum(-1)
    loss = jnp.mean(-jnp.log(pos / (pos + neg)))

    labels = np.asarray(gt_labels).reshape(N, 1)
    gt_set = np.unique(labels)
    neg_ids = np.stack([gt_set[gt_set != l] for l in labels[:, 0]], 0)
    proto_id = np.concatenate([labels, neg_ids], 1)
    cen = [jnp.asarray(c, jnp.float32) for c in cluster_centroids]
    lg = jnp.stack([jnp.sum(f[:, None, :] * c[proto_id], -1)
                    for f, c in zip((st, car, plate), cen)], 0)              # [3, N, K]
    conc = jnp.stack([jnp.asarray(c, jnp.float32) for c in cluster_concentration], 0)
    ft = conc[:, proto_id]                                                   # [3, N, K]
    lg = lg / (ft + 1e-12)
    w3 = jnp.asarray(weight, jnp.float32)[:, None, None] * jnp.ones_like(lg)
    w3 = jnp.where((ft == 0.0) | (lg == 0.0), 0.0, w3)
    lgp = jnp.sum(lg * w3, 0) / (jnp.sum(w3, 0) + 1e-12)
    m = jnp.max(lgp, -1, keepdims=True)
    lse = m + jnp.log(jnp.sum(jnp.exp(lgp - m), -1, keepdims=True))
    loss_p = jnp.mean(lse[:, 0] - lgp[:, 0])
    return loss + loss_p


if __name__ == "__main__":
    B, D, C = 2, 32, 8          # batch=2 -> N=4 rows, feature dim 32, 8 cluster centroids
    temperature = 0.5
    weight = [0.5, 0.3, 0.2]

    key = jax.random.PRNGKey(0)
    keys = jax.random.split(key, 9)
    st_i = jax.random.normal(keys[0], (B, D), jnp.float32)
    st_j = jax.random.normal(keys[1], (B, D), jnp.float32)
    car_i = jax.random.normal(keys[2], (B, D), jnp.float32)
    car_j = jax.random.normal(keys[3], (B, D), jnp.float32)
    plate_i = jax.random.normal(keys[4], (B, D), jnp.float32)
    plate_j = jax.random.normal(keys[5], (B, D), jnp.float32)

    # labels for the 2*B concatenated rows (must index into the C centroids)
    gt_labels = np.array([[1], [3], [5], [7]], dtype=np.int32)

    cen_st = jax.random.normal(keys[6], (C, D), jnp.float32)
    cen_car = jax.random.normal(keys[7], (C, D), jnp.float32)
    cen_plate = jax.random.normal(keys[8], (C, D), jnp.float32)
    conc_st = jnp.linspace(0.2, 1.0, C, dtype=jnp.float32)
    conc_car = jnp.linspace(0.3, 1.1, C, dtype=jnp.float32)
    conc_plate = jnp.linspace(0.4, 1.2, C, dtype=jnp.float32)

    # TODO(synk): the torch module skips the prototypical term when any centroid /
    # concentration entry is None; this synthetic script always supplies them.
    loss = multimodal_prototypical_loss(
        st_i, st_j, car_i, car_j, plate_i, plate_j,
        gt_labels,
        (cen_st, cen_car, cen_plate),
        (conc_st, conc_car, conc_plate),
        weight, temperature)
    loss = jax.block_until_ready(loss)

    ref = _reference_loss(
        st_i, st_j, car_i, car_j, plate_i, plate_j,
        gt_labels,
        (cen_st, cen_car, cen_plate),
        (conc_st, conc_car, conc_plate),
        weight, temperature)

    assert bool(jnp.isfinite(loss)), f"non-finite loss: {loss}"
    assert bool(jnp.allclose(loss, ref, rtol=2e-2, atol=2e-2)), (float(loss), float(ref))
    print("KERNEL_OK")
</pallas_src>

<mosaic_0001>
module attributes {stable_mosaic.version = 11 : i64} {
  func.func @kernel(%arg0: i32, %arg1: memref<4x128xf32, #tpu.memory_space<vmem>>, %arg2: memref<4x128xf32, #tpu.memory_space<vmem>>, %arg3: memref<4x128xf32, #tpu.memory_space<vmem>>, %arg4: memref<4x128xf32, #tpu.memory_space<vmem>>, %arg5: memref<4x128xf32, #tpu.memory_space<vmem>>, %arg6: memref<4x128xf32, #tpu.memory_space<vmem>>, %arg7: memref<3x4xf32, #tpu.memory_space<vmem>>, %arg8: memref<4x1xi32, #tpu.memory_space<vmem>>, %arg9: memref<1x1xf32, #tpu.memory_space<vmem>>, %arg10: memref<4x128xf32, #tpu.memory_space<vmem>>, %arg11: memref<4x128xf32, #tpu.memory_space<vmem>>, %arg12: memref<4x128xf32, #tpu.memory_space<vmem>>, %arg13: memref<4x1xf32, #tpu.memory_space<vmem>>, %arg14: memref<1x4xf32, #tpu.memory_space<vmem>>, %arg15: memref<1x1xf32, #tpu.memory_space<vmem>>) attributes {dimension_semantics = [#tpu.dimension_semantics<arbitrary>], iteration_bounds = array<i64: 1>, scalar_prefetch = 0 : i64, scratch_operands = 6 : i64, tpu.core_type = #tpu.core_type<tc>, window_params = [{pipeline_mode = #tpu.pipeline_mode<synchronous>, transform_indices = @transform_0, window_bounds = array<i64: 4, 128>}, {pipeline_mode = #tpu.pipeline_mode<synchronous>, transform_indices = @transform_1, window_bounds = array<i64: 4, 128>}, {pipeline_mode = #tpu.pipeline_mode<synchronous>, transform_indices = @transform_2, window_bounds = array<i64: 4, 128>}, {pipeline_mode = #tpu.pipeline_mode<synchronous>, transform_indices = @transform_3, window_bounds = array<i64: 4, 128>}, {pipeline_mode = #tpu.pipeline_mode<synchronous>, transform_indices = @transform_4, window_bounds = array<i64: 4, 128>}, {pipeline_mode = #tpu.pipeline_mode<synchronous>, transform_indices = @transform_5, window_bounds = array<i64: 4, 128>}, {pipeline_mode = #tpu.pipeline_mode<synchronous>, transform_indices = @transform_6, window_bounds = array<i64: 3, 4>}, {pipeline_mode = #tpu.pipeline_mode<synchronous>, transform_indices = @transform_7, window_bounds = array<i64: 4, 1>}, {pipeline_mode = #tpu.pipeline_mode<synchronous>, transform_indices = @transform_8, window_bounds = array<i64: 1, 1>}]} {
    %c4_i32 = arith.constant 4 : i32
    %0 = arith.muli %arg0, %c4_i32 : i32
    %c0_i32 = arith.constant 0 : i32
    %1 = arith.cmpi eq, %arg0, %c0_i32 : i32
    %2 = arith.extui %1 : i1 to i32
    %c0_i32_0 = arith.constant 0 : i32
    %3 = arith.cmpi ne, %2, %c0_i32_0 : i32
    scf.if %3 {
      %c0_76 = arith.constant 0 : index
      %c0_77 = arith.constant 0 : index
      %169 = vector.load %arg1[%c0_76, %c0_77] : memref<4x128xf32, #tpu.memory_space<vmem>>, vector<4x128xf32>
      %170 = arith.mulf %169, %169 : vector<4x128xf32>
      %cst_78 = arith.constant dense<0.000000e+00> : vector<4xf32>
      %171 = vector.multi_reduction <add>, %170, %cst_78 [1] : vector<4x128xf32> to vector<4xf32>
      %172 = vector.shape_cast %171 : vector<4xf32> to vector<4x1xf32>
      %cst_79 = arith.constant 1.000000e-24 : f32
      %173 = vector.broadcast %cst_79 : f32 to vector<4x1xf32>
      %174 = arith.maximumf %172, %173 : vector<4x1xf32>
      %175 = math.rsqrt %174 : vector<4x1xf32>
      %176 = vector.broadcast %175 : vector<4x1xf32> to vector<4x128xf32>
      %177 = arith.mulf %169, %176 : vector<4x128xf32>
      %c0_80 = arith.constant 0 : index
      %c0_81 = arith.constant 0 : index
      %178 = vector.load %arg10[%c0_80, %c0_81] : memref<4x128xf32, #tpu.memory_space<vmem>>, vector<4x128xf32>
      tpu.vector_store %arg10[%c0_80, %c0_81], %177 {strides = array<i32>} : memref<4x128xf32, #tpu.memory_space<vmem>>, vector<4x128xf32>,
      %c0_82 = arith.constant 0 : index
      %c0_83 = arith.constant 0 : index
      %179 = vector.load %arg2[%c0_82, %c0_83] : memref<4x128xf32, #tpu.memory_space<vmem>>, vector<4x128xf32>
      %180 = arith.mulf %179, %179 : vector<4x128xf32>
      %cst_84 = arith.constant dense<0.000000e+00> : vector<4xf32>
      %181 = vector.multi_reduction <add>, %180, %cst_84 [1] : vector<4x128xf32> to vector<4xf32>
      %182 = vector.shape_cast %181 : vector<4xf32> to vector<4x1xf32>
      %cst_85 = arith.constant 1.000000e-24 : f32
      %183 = vector.broadcast %cst_85 : f32 to vector<4x1xf32>
      %184 = arith.maximumf %182, %183 : vector<4x1xf32>
      %185 = math.rsqrt %184 : vector<4x1xf32>
      %186 = vector.broadcast %185 : vector<4x1xf32> to vector<4x128xf32>
      %187 = arith.mulf %179, %186 : vector<4x128xf32>
      %c0_86 = arith.constant 0 : index
      %c0_87 = arith.constant 0 : index
      %188 = vector.load %arg11[%c0_86, %c0_87] : memref<4x128xf32, #tpu.memory_space<vmem>>, vector<4x128xf32>
      tpu.vector_store %arg11[%c0_86, %c0_87], %187 {strides = array<i32>} : memref<4x128xf32, #tpu.memory_space<vmem>>, vector<4x128xf32>,
      %c0_88 = arith.constant 0 : index
      %c0_89 = arith.constant 0 : index
      %189 = vector.load %arg3[%c0_88, %c0_89] : memref<4x128xf32, #tpu.memory_space<vmem>>, vector<4x128xf32>
      %190 = arith.mulf %189, %189 : vector<4x128xf32>
      %cst_90 = arith.constant dense<0.000000e+00> : vector<4xf32>
      %191 = vector.multi_reduction <add>, %190, %cst_90 [1] : vector<4x128xf32> to vector<4xf32>
      %192 = vector.shape_cast %191 : vector<4xf32> to vector<4x1xf32>
      %cst_91 = arith.constant 1.000000e-24 : f32
      %193 = vector.broadcast %cst_91 : f32 to vector<4x1xf32>
      %194 = arith.maximumf %192, %193 : vector<4x1xf32>
      %195 = math.rsqrt %194 : vector<4x1xf32>
      %196 = vector.broadcast %195 : vector<4x1xf32> to vector<4x128xf32>
      %197 = arith.mulf %189, %196 : vector<4x128xf32>
      %c0_92 = arith.constant 0 : index
      %c0_93 = arith.constant 0 : index
      %198 = vector.load %arg12[%c0_92, %c0_93] : memref<4x128xf32, #tpu.memory_space<vmem>>, vector<4x128xf32>
      tpu.vector_store %arg12[%c0_92, %c0_93], %197 {strides = array<i32>} : memref<4x128xf32, #tpu.memory_space<vmem>>, vector<4x128xf32>,
      %cst_94 = arith.constant 0.000000e+00 : f32
      %199 = vector.broadcast %cst_94 : f32 to vector<1x4xf32>
      %c0_95 = arith.constant 0 : index
      %c0_96 = arith.constant 0 : index
      %200 = vector.load %arg14[%c0_95, %c0_96] : memref<1x4xf32, #tpu.memory_space<vmem>>, vector<1x4xf32>
      tpu.vector_store %arg14[%c0_95, %c0_96], %199 {strides = array<i32>} : memref<1x4xf32, #tpu.memory_space<vmem>>, vector<1x4xf32>,
      %cst_97 = arith.constant 0.000000e+00 : f32
      %201 = vector.broadcast %cst_97 : f32 to vector<1x1xf32>
      %c0_98 = arith.constant 0 : index
      %c0_99 = arith.constant 0 : index
      %202 = vector.load %arg15[%c0_98, %c0_99] : memref<1x1xf32, #tpu.memory_space<vmem>>, vector<1x1xf32>
      tpu.vector_store %arg15[%c0_98, %c0_99], %201 {strides = array<i32>} : memref<1x1xf32, #tpu.memory_space<vmem>>, vector<1x1xf32>,
    } else {
    }
    %4 = arith.index_cast %0 : i32 to index
    %c0 = arith.constant 0 : index
    %5 = vector.load %arg10[%4, %c0] : memref<4x128xf32, #tpu.memory_space<vmem>>, vector<4x128xf32>
    %6 = arith.index_cast %0 : i32 to index
    %c0_1 = arith.constant 0 : index
    %7 = vector.load %arg11[%6, %c0_1] : memref<4x128xf32, #tpu.memory_space<vmem>>, vector<4x128xf32>
    %8 = arith.index_cast %0 : i32 to index
    %c0_2 = arith.constant 0 : index
    %9 = vector.load %arg12[%8, %c0_2] : memref<4x128xf32, #tpu.memory_space<vmem>>, vector<4x128xf32>
    %cst = arith.constant 0.000000e+00 : f32
    %10 = vector.broadcast %cst : f32 to vector<4x4xf32>
    %cst_3 = arith.constant 0.000000e+00 : f32
    %11 = vector.broadcast %cst_3 : f32 to vector<4x4xf32>
    %c0_4 = arith.constant 0 : index
    %c0_5 = arith.constant 0 : index
    %12 = vector.load %arg10[%c0_4, %c0_5] : memref<4x128xf32, #tpu.memory_space<vmem>>, vector<4x128xf32>
    %cst_6 = arith.constant dense<0.000000e+00> : vector<4x4xf32>
    %13 = tpu.matmul %5, %12, %cst_6 {dimension_numbers = #tpu.dot_dimension_numbers<[1], [1], [0], [0], [0, 0, 1, 0], [], []>} : vector<4x128xf32>, vector<4x128xf32>, vector<4x4xf32> -> vector<4x4xf32>
    %cst_7 = arith.constant 0.000000e+00 : f32
    %14 = vector.broadcast %cst_7 : f32 to vector<4x4xf32>
    %15 = arith.cmpf oeq, %13, %14 : vector<4x4xf32>
    %cst_8 = arith.constant 0.000000e+00 : f32
    %cst_9 = arith.constant 5.000000e-01 : f32
    %16 = vector.broadcast %cst_8 : f32 to vector<4x4xf32>
    %17 = vector.broadcast %cst_9 : f32 to vector<4x4xf32>
    %18 = arith.select %15, %16, %17 : vector<4x4xi1>, vector<4x4xf32>
    %19 = arith.mulf %13, %18 : vector<4x4xf32>
    %20 = arith.addf %10, %19 : vector<4x4xf32>
    %21 = arith.addf %11, %18 : vector<4x4xf32>
    %c0_10 = arith.constant 0 : index
    %c0_11 = arith.constant 0 : index
    %22 = vector.load %arg11[%c0_10, %c0_11] : memref<4x128xf32, #tpu.memory_space<vmem>>, vector<4x128xf32>
    %cst_12 = arith.constant dense<0.000000e+00> : vector<4x4xf32>
    %23 = tpu.matmul %7, %22, %cst_12 {dimension_numbers = #tpu.dot_dimension_numbers<[1], [1], [0], [0], [0, 0, 1, 0], [], []>} : vector<4x128xf32>, vector<4x128xf32>, vector<4x4xf32> -> vector<4x4xf32>
    %cst_13 = arith.constant 0.000000e+00 : f32
    %24 = vector.broadcast %cst_13 : f32 to vector<4x4xf32>
    %25 = arith.cmpf oeq, %23, %24 : vector<4x4xf32>
    %cst_14 = arith.constant 0.000000e+00 : f32
    %cst_15 = arith.constant 3.000000e-01 : f32
    %26 = vector.broadcast %cst_14 : f32 to vector<4x4xf32>
    %27 = vector.broadcast %cst_15 : f32 to vector<4x4xf32>
    %28 = arith.select %25, %26, %27 : vector<4x4xi1>, vector<4x4xf32>
    %29 = arith.mulf %23, %28 : vector<4x4xf32>
    %30 = arith.addf %20, %29 : vector<4x4xf32>
    %31 = arith.addf %21, %28 : vector<4x4xf32>
    %c0_16 = arith.constant 0 : index
    %c0_17 = arith.constant 0 : index
    %32 = vector.load %arg12[%c0_16, %c0_17] : memref<4x128xf32, #tpu.memory_space<vmem>>, vector<4x128xf32>
    %cst_18 = arith.constant dense<0.000000e+00> : vector<4x4xf32>
    %33 = tpu.matmul %9, %32, %cst_18 {dimension_numbers = #tpu.dot_dimension_numbers<[1], [1], [0], [0], [0, 0, 1, 0], [], []>} : vector<4x128xf32>, vector<4x128xf32>, vector<4x4xf32> -> vector<4x4xf32>
    %cst_19 = arith.constant 0.000000e+00 : f32
    %34 = vector.broadcast %cst_19 : f32 to vector<4x4xf32>
    %35 = arith.cmpf oeq, %33, %34 : vector<4x4xf32>
    %cst_20 = arith.constant 0.000000e+00 : f32
    %cst_21 = arith.constant 2.000000e-01 : f32
    %36 = vector.broadcast %cst_20 : f32 to vector<4x4xf32>
    %37 = vector.broadcast %cst_21 : f32 to vector<4x4xf32>
    %38 = arith.select %35, %36, %37 : vector<4x4xi1>, vector<4x4xf32>
    %39 = arith.mulf %33, %38 : vector<4x4xf32>
    %40 = arith.addf %30, %39 : vector<4x4xf32>
    %41 = arith.addf %31, %38 : vector<4x4xf32>
    %cst_22 = arith.constant 9.99999996E-13 : f32
    %42 = vector.broadcast %cst_22 : f32 to vector<4x4xf32>
    %43 = arith.addf %41, %42 : vector<4x4xf32>
    %44 = tpu.reciprocal %43 {approx = true} : vector<4x4xf32> -> vector<4x4xf32>
    %45 = arith.mulf %40, %44 : vector<4x4xf32>
    %cst_23 = arith.constant 2.000000e+00 : f32
    %46 = vector.broadcast %cst_23 : f32 to vector<4x4xf32>
    %47 = arith.mulf %45, %46 : vector<4x4xf32>
    %48 = math.exp %47 : vector<4x4xf32>
    %49 = tpu.iota {dimensions = array<i32: 0>} : vector<4x4xi32>
    %50 = vector.broadcast %0 : i32 to vector<4x4xi32>
    %51 = arith.addi %50, %49 : vector<4x4xi32>
    %52 = tpu.iota {dimensions = array<i32: 1>} : vector<4x4xi32>
    %53 = arith.subi %51, %52 : vector<4x4xi32>
    %54 = math.absi %53 : vector<4x4xi32>
    %c2_i32 = arith.constant 2 : i32
    %55 = vector.broadcast %c2_i32 : i32 to vector<4x4xi32>
    %56 = arith.cmpi eq, %54, %55 : vector<4x4xi32>
    %c0_i32_24 = arith.constant 0 : i32
    %57 = vector.broadcast %c0_i32_24 : i32 to vector<4x4xi32>
    %58 = arith.cmpi ne, %54, %57 : vector<4x4xi32>
    %c2_i32_25 = arith.constant 2 : i32
    %59 = vector.broadcast %c2_i32_25 : i32 to vector<4x4xi32>
    %60 = arith.cmpi ne, %54, %59 : vector<4x4xi32>
    %61 = arith.andi %58, %60 : vector<4x4xi1>
    %cst_26 = arith.constant 0.000000e+00 : f32
    %62 = vector.broadcast %cst_26 : f32 to vector<4x4xf32>
    %63 = arith.select %56, %48, %62 : vector<4x4xi1>, vector<4x4xf32>
    %cst_27 = arith.constant dense<0.000000e+00> : vector<4xf32>
    %64 = vector.multi_reduction <add>, %63, %cst_27 [1] : vector<4x4xf32> to vector<4xf32>
    %65 = vector.shape_cast %64 : vector<4xf32> to vector<4x1xf32>
    %66 = arith.index_cast %0 : i32 to index
    %c0_28 = arith.constant 0 : index
    %67 = vector.load %arg13[%66, %c0_28] : memref<4x1xf32, #tpu.memory_space<vmem>>, vector<4x1xf32>
    tpu.vector_store %arg13[%66, %c0_28], %65 {strides = array<i32>} : memref<4x1xf32, #tpu.memory_space<vmem>>, vector<4x1xf32>,
    %c0_29 = arith.constant 0 : index
    %c0_30 = arith.constant 0 : index
    %68 = vector.load %arg14[%c0_29, %c0_30] : memref<1x4xf32, #tpu.memory_space<vmem>>, vector<1x4xf32>
    %cst_31 = arith.constant 0.000000e+00 : f32
    %69 = vector.broadcast %cst_31 : f32 to vector<4x4xf32>
    %70 = arith.select %61, %48, %69 : vector<4x4xi1>, vector<4x4xf32>
    %cst_32 = arith.constant dense<0.000000e+00> : vector<4xf32>
    %71 = vector.multi_reduction <add>, %70, %cst_32 [0] : vector<4x4xf32> to vector<4xf32>
    %72 = vector.shape_cast %71 : vector<4xf32> to vector<1x4xf32>
    %73 = arith.addf %68, %72 : vector<1x4xf32>
    %c0_33 = arith.constant 0 : index
    %c0_34 = arith.constant 0 : index
    %74 = vector.load %arg14[%c0_33, %c0_34] : memref<1x4xf32, #tpu.memory_space<vmem>>, vector<1x4xf32>
    tpu.vector_store %arg14[%c0_33, %c0_34], %73 {strides = array<i32>} : memref<1x4xf32, #tpu.memory_space<vmem>>, vector<1x4xf32>,
    %c0_35 = arith.constant 0 : index
    %c0_36 = arith.constant 0 : index
    %75 = vector.load %arg7[%c0_35, %c0_36] : memref<3x4xf32, #tpu.memory_space<vmem>>, vector<3x4xf32>
    %cst_37 = arith.constant 0.000000e+00 : f32
    %76 = vector.broadcast %cst_37 : f32 to vector<4x4xf32>
    %cst_38 = arith.constant 0.000000e+00 : f32
    %77 = vector.broadcast %cst_38 : f32 to vector<4x4xf32>
    %c0_39 = arith.constant 0 : index
    %c0_40 = arith.constant 0 : index
    %78 = vector.load %arg4[%c0_39, %c0_40] : memref<4x128xf32, #tpu.memory_space<vmem>>, vector<4x128xf32>
    %cst_41 = arith.constant dense<0.000000e+00> : vector<4x4xf32>
    %79 = tpu.matmul %5, %78, %cst_41 {dimension_numbers = #tpu.dot_dimension_numbers<[1], [1], [0], [0], [0, 0, 1, 0], [], []>} : vector<4x128xf32>, vector<4x128xf32>, vector<4x4xf32> -> vector<4x4xf32>
    %80 = vector.extract_strided_slice %75 {offsets = [0, 0], sizes = [1, 4], strides = [1, 1]} : vector<3x4xf32> to vector<1x4xf32>
    %cst_42 = arith.constant 9.99999996E-13 : f32
    %81 = vector.broadcast %cst_42 : f32 to vector<1x4xf32>
    %82 = arith.addf %80, %81 : vector<1x4xf32>
    %83 = tpu.reciprocal %82 {approx = true} : vector<1x4xf32> -> vector<1x4xf32>
    %84 = vector.broadcast %83 : vector<1x4xf32> to vector<4x4xf32>
    %85 = arith.mulf %79, %84 : vector<4x4xf32>
    %cst_43 = arith.constant 0.000000e+00 : f32
    %86 = vector.broadcast %cst_43 : f32 to vector<1x4xf32>
    %87 = arith.cmpf oeq, %80, %86 : vector<1x4xf32>
    %cst_44 = arith.constant 0.000000e+00 : f32
    %88 = vector.broadcast %cst_44 : f32 to vector<4x4xf32>
    %89 = arith.cmpf oeq, %85, %88 : vector<4x4xf32>
    %90 = vector.broadcast %87 : vector<1x4xi1> to vector<4x4xi1>
    %91 = arith.ori %90, %89 : vector<4x4xi1>
    %cst_45 = arith.constant 0.000000e+00 : f32
    %cst_46 = arith.constant 5.000000e-01 : f32
    %92 = vector.broadcast %cst_45 : f32 to vector<4x4xf32>
    %93 = vector.broadcast %cst_46 : f32 to vector<4x4xf32>
    %94 = arith.select %91, %92, %93 : vector<4x4xi1>, vector<4x4xf32>
    %95 = arith.mulf %85, %94 : vector<4x4xf32>
    %96 = arith.addf %76, %95 : vector<4x4xf32>
    %97 = arith.addf %77, %94 : vector<4x4xf32>
    %c0_47 = arith.constant 0 : index
    %c0_48 = arith.constant 0 : index
    %98 = vector.load %arg5[%c0_47, %c0_48] : memref<4x128xf32, #tpu.memory_space<vmem>>, vector<4x128xf32>
    %cst_49 = arith.constant dense<0.000000e+00> : vector<4x4xf32>
    %99 = tpu.matmul %7, %98, %cst_49 {dimension_numbers = #tpu.dot_dimension_numbers<[1], [1], [0], [0], [0, 0, 1, 0], [], []>} : vector<4x128xf32>, vector<4x128xf32>, vector<4x4xf32> -> vector<4x4xf32>
    %100 = vector.extract_strided_slice %75 {offsets = [1, 0], sizes = [1, 4], strides = [1, 1]} : vector<3x4xf32> to vector<1x4xf32>
    %cst_50 = arith.constant 9.99999996E-13 : f32
    %101 = vector.broadcast %cst_50 : f32 to vector<1x4xf32>
    %102 = arith.addf %100, %101 : vector<1x4xf32>
    %103 = tpu.reciprocal %102 {approx = true} : vector<1x4xf32> -> vector<1x4xf32>
    %104 = vector.broadcast %103 : vector<1x4xf32> to vector<4x4xf32>
    %105 = arith.mulf %99, %104 : vector<4x4xf32>
    %cst_51 = arith.constant 0.000000e+00 : f32
    %106 = vector.broadcast %cst_51 : f32 to vector<1x4xf32>
    %107 = arith.cmpf oeq, %100, %106 : vector<1x4xf32>
    %cst_52 = arith.constant 0.000000e+00 : f32
    %108 = vector.broadcast %cst_52 : f32 to vector<4x4xf32>
    %109 = arith.cmpf oeq, %105, %108 : vector<4x4xf32>
    %110 = vector.broadcast %107 : vector<1x4xi1> to vector<4x4xi1>
    %111 = arith.ori %110, %109 : vector<4x4xi1>
    %cst_53 = arith.constant 0.000000e+00 : f32
    %cst_54 = arith.constant 3.000000e-01 : f32
    %112 = vector.broadcast %cst_53 : f32 to vector<4x4xf32>
    %113 = vector.broadcast %cst_54 : f32 to vector<4x4xf32>
    %114 = arith.select %111, %112, %113 : vector<4x4xi1>, vector<4x4xf32>
    %115 = arith.mulf %105, %114 : vector<4x4xf32>
    %116 = arith.addf %96, %115 : vector<4x4xf32>
    %117 = arith.addf %97, %114 : vector<4x4xf32>
    %c0_55 = arith.constant 0 : index
    %c0_56 = arith.constant 0 : index
    %118 = vector.load %arg6[%c0_55, %c0_56] : memref<4x128xf32, #tpu.memory_space<vmem>>, vector<4x128xf32>
    %cst_57 = arith.constant dense<0.000000e+00> : vector<4x4xf32>
    %119 = tpu.matmul %9, %118, %cst_57 {dimension_numbers = #tpu.dot_dimension_numbers<[1], [1], [0], [0], [0, 0, 1, 0], [], []>} : vector<4x128xf32>, vector<4x128xf32>, vector<4x4xf32> -> vector<4x4xf32>
    %120 = vector.extract_strided_slice %75 {offsets = [2, 0], sizes = [1, 4], strides = [1, 1]} : vector<3x4xf32> to vector<1x4xf32>
    %cst_58 = arith.constant 9.99999996E-13 : f32
    %121 = vector.broadcast %cst_58 : f32 to vector<1x4xf32>
    %122 = arith.addf %120, %121 : vector<1x4xf32>
    %123 = tpu.reciprocal %122 {approx = true} : vector<1x4xf32> -> vector<1x4xf32>
    %124 = vector.broadcast %123 : vector<1x4xf32> to vector<4x4xf32>
    %125 = arith.mulf %119, %124 : vector<4x4xf32>
    %cst_59 = arith.constant 0.000000e+00 : f32
    %126 = vector.broadcast %cst_59 : f32 to vector<1x4xf32>
    %127 = arith.cmpf oeq, %120, %126 : vector<1x4xf32>
    %cst_60 = arith.constant 0.000000e+00 : f32
    %128 = vector.broadcast %cst_60 : f32 to vector<4x4xf32>
    %129 = arith.cmpf oeq, %125, %128 : vector<4x4xf32>
    %130 = vector.broadcast %127 : vector<1x4xi1> to vector<4x4xi1>
    %131 = arith.ori %130, %129 : vector<4x4xi1>
    %cst_61 = arith.constant 0.000000e+00 : f32
    %cst_62 = arith.constant 2.000000e-01 : f32
    %132 = vector.broadcast %cst_61 : f32 to vector<4x4xf32>
    %133 = vector.broadcast %cst_62 : f32 to vector<4x4xf32>
    %134 = arith.select %131, %132, %133 : vector<4x4xi1>, vector<4x4xf32>
    %135 = arith.mulf %125, %134 : vector<4x4xf32>
    %136 = arith.addf %116, %135 : vector<4x4xf32>
    %137 = arith.addf %117, %134 : vector<4x4xf32>
    %cst_63 = arith.constant 9.99999996E-13 : f32
    %138 = vector.broadcast %cst_63 : f32 to vector<4x4xf32>
    %139 = arith.addf %137, %138 : vector<4x4xf32>
    %140 = tpu.reciprocal %139 {approx = true} : vector<4x4xf32> -> vector<4x4xf32>
    %141 = arith.mulf %136, %140 : vector<4x4xf32>
    %142 = arith.index_cast %0 : i32 to index
    %c0_64 = arith.constant 0 : index
    %143 = vector.load %arg8[%142, %c0_64] : memref<4x1xi32, #tpu.memory_space<vmem>>, vector<4x1xi32>
    %144 = tpu.iota {dimensions = array<i32: 1>} : vector<4x4xi32>
    %145 = vector.broadcast %143 : vector<4x1xi32> to vector<4x4xi32>
    %146 = arith.cmpi eq, %144, %145 : vector<4x4xi32>
    %cst_65 = arith.constant 0.000000e+00 : f32
    %147 = vector.broadcast %cst_65 : f32 to vector<4x4xf32>
    %148 = arith.select %146, %141, %147 : vector<4x4xi1>, vector<4x4xf32>
    %cst_66 = arith.constant dense<0.000000e+00> : vector<4xf32>
    %149 = vector.multi_reduction <add>, %148, %cst_66 [1] : vector<4x4xf32> to vector<4xf32>
    %150 = vector.shape_cast %149 : vector<4xf32> to vector<4x1xf32>
    %cst_67 = arith.constant dense<0xFF800000> : vector<4xf32>
    %151 = vector.multi_reduction <maximumf>, %141, %cst_67 [1] : vector<4x4xf32> to vector<4xf32>
    %152 = vector.shape_cast %151 : vector<4xf32> to vector<4x1xf32>
    %153 = vector.broadcast %152 : vector<4x1xf32> to vector<4x4xf32>
    %154 = arith.subf %141, %153 : vector<4x4xf32>
    %155 = math.exp %154 : vector<4x4xf32>
    %cst_68 = arith.constant dense<0.000000e+00> : vector<4xf32>
    %156 = vector.multi_reduction <add>, %155, %cst_68 [1] : vector<4x4xf32> to vector<4xf32>
    %157 = vector.shape_cast %156 : vector<4xf32> to vector<4x1xf32>
    %158 = math.log %157 : vector<4x1xf32>
    %159 = arith.addf %152, %158 : vector<4x1xf32>
    %c0_69 = arith.constant 0 : index
    %c0_70 = arith.constant 0 : index
    %160 = vector.load %arg15[%c0_69, %c0_70] : memref<1x1xf32, #tpu.memory_space<vmem>>, vector<1x1xf32>
    %161 = arith.subf %159, %150 : vector<4x1xf32>
    %cst_71 = arith.constant dense<0.000000e+00> : vector<1xf32>
    %162 = vector.multi_reduction <add>, %161, %cst_71 [0] : vector<4x1xf32> to vector<1xf32>
    %163 = vector.shape_cast %162 : vector<1xf32> to vector<1x1xf32>
    %164 = arith.addf %160, %163 : vector<1x1xf32>
    %c0_72 = arith.constant 0 : index
    %c0_73 = arith.constant 0 : index
    %165 = vector.load %arg15[%c0_72, %c0_73] : memref<1x1xf32, #tpu.memory_space<vmem>>, vector<1x1xf32>
    tpu.vector_store %arg15[%c0_72, %c0_73], %164 {strides = array<i32>} : memref<1x1xf32, #tpu.memory_space<vmem>>, vector<1x1xf32>,
    %c0_i32_74 = arith.constant 0 : i32
    %166 = arith.cmpi eq, %arg0, %c0_i32_74 : i32
    %167 = arith.extui %166 : i1 to i32
    %c0_i32_75 = arith.constant 0 : i32
    %168 = arith.cmpi ne, %167, %c0_i32_75 : i32
    scf.if %168 {
      %c0_76 = arith.constant 0 : index
      %c0_77 = arith.constant 0 : index
      %169 = vector.load %arg14[%c0_76, %c0_77] : memref<1x4xf32, #tpu.memory_space<vmem>>, vector<1x4xf32>
      %c0_78 = arith.constant 0 : index
      %c0_79 = arith.constant 0 : index
      %170 = vector.load %arg13[%c0_78, %c0_79] : memref<4x1xf32, #tpu.memory_space<vmem>>, vector<4x1xf32>
      %171 = vector.broadcast %170 : vector<4x1xf32> to vector<4x4xf32>
      %172 = vector.broadcast %169 : vector<1x4xf32> to vector<4x4xf32>
      %173 = arith.addf %171, %172 : vector<4x4xf32>
      %174 = math.log %173 : vector<4x4xf32>
      %175 = vector.shape_cast %174 : vector<4x4xf32> to vector<1x4x4xf32>
      %cst_80 = arith.constant dense<0.000000e+00> : vector<1xf32>
      %176 = vector.multi_reduction <add>, %175, %cst_80 [1, 2] : vector<1x4x4xf32> to vector<1xf32>
      %177 = vector.shape_cast %176 : vector<1xf32> to vector<1x1x1xf32>
      %178 = vector.extract %177[0, 0, 0] : f32 from vector<1x1x1xf32>
      %179 = vector.broadcast %178 : f32 to vector<1x1xf32>
      %c0_81 = arith.constant 0 : index
      %c0_82 = arith.constant 0 : index
      %180 = vector.load %arg13[%c0_81, %c0_82] : memref<4x1xf32, #tpu.memory_space<vmem>>, vector<4x1xf32>
      %181 = math.log %180 : vector<4x1xf32>
      %182 = vector.shape_cast %181 : vector<4x1xf32> to vector<1x4x1xf32>
      %cst_83 = arith.constant dense<0.000000e+00> : vector<1xf32>
      %183 = vector.multi_reduction <add>, %182, %cst_83 [1, 2] : vector<1x4x1xf32> to vector<1xf32>
      %184 = vector.shape_cast %183 : vector<1xf32> to vector<1x1x1xf32>
      %185 = vector.extract %184[0, 0, 0] : f32 from vector<1x1x1xf32>
      %186 = vector.broadcast %185 : f32 to vector<1x1xf32>
      %cst_84 = arith.constant 6.250000e-02 : f32
      %187 = vector.broadcast %cst_84 : f32 to vector<1x1xf32>
      %188 = arith.mulf %179, %187 : vector<1x1xf32>
      %cst_85 = arith.constant 2.500000e-01 : f32
      %189 = vector.broadcast %cst_85 : f32 to vector<1x1xf32>
      %190 = arith.mulf %186, %189 : vector<1x1xf32>
      %191 = arith.subf %188, %190 : vector<1x1xf32>
      %c0_86 = arith.constant 0 : index
      %c0_87 = arith.constant 0 : index
      %192 = vector.load %arg15[%c0_86, %c0_87] : memref<1x1xf32, #tpu.memory_space<vmem>>, vector<1x1xf32>
      %cst_88 = arith.constant 2.500000e-01 : f32
      %193 = vector.broadcast %cst_88 : f32 to vector<1x1xf32>
      %194 = arith.mulf %192, %193 : vector<1x1xf32>
      %195 = arith.addf %191, %194 : vector<1x1xf32>
      %c0_89 = arith.constant 0 : index
      %c0_90 = arith.constant 0 : index
      %196 = vector.load %arg9[%c0_89, %c0_90] : memref<1x1xf32, #tpu.memory_space<vmem>>, vector<1x1xf32>
      tpu.vector_store %arg9[%c0_89, %c0_90], %195 {strides = array<i32>} : memref<1x1xf32, #tpu.memory_space<vmem>>, vector<1x1xf32>,
    } else {
    }
    return
  }
  func.func @transform_0(%arg0: i32) -> (i32, i32) {
    %c0_i32 = arith.constant 0 : i32
    %c0_i32_0 = arith.constant 0 : i32
    %c0_i32_1 = arith.constant 0 : i32
    return %c0_i32, %c0_i32_0 : i32, i32
  }
  func.func @transform_1(%arg0: i32) -> (i32, i32) {
    %c0_i32 = arith.constant 0 : i32
    %c0_i32_0 = arith.constant 0 : i32
    %c0_i32_1 = arith.constant 0 : i32
    return %c0_i32, %c0_i32_0 : i32, i32
  }
  func.func @transform_2(%arg0: i32) -> (i32, i32) {
    %c0_i32 = arith.constant 0 : i32
    %c0_i32_0 = arith.constant 0 : i32
    %c0_i32_1 = arith.constant 0 : i32
    return %c0_i32, %c0_i32_0 : i32, i32
  }
  func.func @transform_3(%arg0: i32) -> (i32, i32) {
    %c0_i32 = arith.constant 0 : i32
    %c0_i32_0 = arith.constant 0 : i32
    %c0_i32_1 = arith.constant 0 : i32
    return %c0_i32, %c0_i32_0 : i32, i32
  }
  func.func @transform_4(%arg0: i32) -> (i32, i32) {
    %c0_i32 = arith.constant 0 : i32
    %c0_i32_0 = arith.constant 0 : i32
    %c0_i32_1 = arith.constant 0 : i32
    return %c0_i32, %c0_i32_0 : i32, i32
  }
  func.func @transform_5(%arg0: i32) -> (i32, i32) {
    %c0_i32 = arith.constant 0 : i32
    %c0_i32_0 = arith.constant 0 : i32
    %c0_i32_1 = arith.constant 0 : i32
    return %c0_i32, %c0_i32_0 : i32, i32
  }
  func.func @transform_6(%arg0: i32) -> (i32, i32) {
    %c0_i32 = arith.constant 0 : i32
    %c0_i32_0 = arith.constant 0 : i32
    %c0_i32_1 = arith.constant 0 : i32
    return %c0_i32, %c0_i32_0 : i32, i32
  }
  func.func @transform_7(%arg0: i32) -> (i32, i32) {
    %c0_i32 = arith.constant 0 : i32
    %c0_i32_0 = arith.constant 0 : i32
    %c0_i32_1 = arith.constant 0 : i32
    return %c0_i32, %c0_i32_0 : i32, i32
  }
  func.func @transform_8(%arg0: i32) -> (i32, i32) {
    %c0_i32 = arith.constant 0 : i32
    %c0_i32_0 = arith.constant 0 : i32
    %c0_i32_1 = arith.constant 0 : i32
    return %c0_i32, %c0_i32_0 : i32, i32
  }
}

</mosaic_0001>

<llo_original>
// kernel: tpu_custom_call.1
$region0: #{tpu_custom_call.1}
  #allocation0 [shape = 'u32[]', space=smem, size = 0x4, offset = 0x4, fixed_abs, tag = 'smem constant byte address 0x4 - core index']
  #allocation1 [shape = 'u32[72,128]{1,0:T(1,128)}', space=vmem, size = 0x9000, scoped, tag = 'internal scratch']
  #allocation2 [shape = 'f32[4,128]{1,0:T(4,128)}', space=vmem, size = 0x800, scoped, tag = 'scratch operand']
  #allocation3 [shape = 'f32[4,128]{1,0:T(4,128)}', space=vmem, size = 0x800, scoped, tag = 'scratch operand']
  #allocation4 [shape = 'f32[4,128]{1,0:T(4,128)}', space=vmem, size = 0x800, scoped, tag = 'scratch operand']
  #allocation5 [shape = 'f32[4,1]{1,0:T(4,128)}', space=vmem, size = 0x800, scoped, tag = 'scratch operand']
  #allocation6 [shape = 'f32[1,4]{1,0:T(1,128)}', space=vmem, size = 0x200, scoped, tag = 'scratch operand']
  #allocation7 [shape = 'f32[1,1]{1,0:T(1,128)}', space=vmem, size = 0x200, scoped, tag = 'scratch operand']
  %s0 = inlined_call_operand.vmem [shape: f32[4,128], index: 0, kind: input, shape index: {}]
  %s1 = inlined_call_operand.hbm [shape: f32[4,128], index: 1, kind: input, shape index: {}]
  %s2 = inlined_call_operand.hbm [shape: f32[4,128], index: 2, kind: input, shape index: {}]
  %s3 = inlined_call_operand.hbm [shape: f32[4,128], index: 3, kind: input, shape index: {}]
  %s4 = inlined_call_operand.vmem [shape: f32[4,128], index: 4, kind: input, shape index: {}]
  %s5 = inlined_call_operand.hbm [shape: f32[4,128], index: 5, kind: input, shape index: {}]
  %s6 = inlined_call_operand.hbm [shape: f32[3,4], index: 6, kind: input, shape index: {}]
  %s7 = inlined_call_operand.vmem [shape: s32[4,1], index: 7, kind: input, shape index: {}]
  %s8 = inlined_call_operand.hbm [shape: f32[1,1], index: 8, kind: output, shape index: {}]
  %s9 = sld [smem:[#allocation0]]
  $region70: #{tpu_custom_call.1} parent=0
    _
  %s11 = ssub.s32 1, %s9
  %s12 = scalar_select 0, %s11, %s9
  $region1: #{tpu_custom_call.1} parent=0
    #allocation8 [shape = 'u8[2048]{0}', space=vmem, size = 0x800, scoped, tag = 'input window, operand 1, single buffered']
    #allocation9 [shape = 's32[1]{0}', space=sflag, size = 0x4, scoped, tag = 'scoped memory for tpu_custom_call.1']
    #allocation10 [shape = 's32[1]{0}', space=sflag, size = 0x4, scoped, tag = 'scoped memory for tpu_custom_call.1']
    #allocation11 [shape = 'u8[2048]{0}', space=vmem, size = 0x800, scoped, tag = 'input window, operand 2, single buffered']
    #allocation12 [shape = 's32[1]{0}', space=sflag, size = 0x4, scoped, tag = 'scoped memory for tpu_custom_call.1']
    #allocation13 [shape = 'u8[2048]{0}', space=vmem, size = 0x800, scoped, tag = 'input window, operand 3, single buffered']
    #allocation14 [shape = 'u8[2048]{0}', space=vmem, size = 0x800, scoped, tag = 'input window, operand 5, single buffered']
    #allocation15 [shape = 's32[1]{0}', space=sflag, size = 0x4, scoped, tag = 'scoped memory for tpu_custom_call.1']
    #allocation16 [shape = 'u8[2048]{0}', space=vmem, size = 0x800, scoped, tag = 'input window, operand 6, single buffered']
    #allocation17 [shape = 'u8[512]{0}', space=vmem, size = 0x400, scoped, tag = 'output window, operand 0, single buffered']
    %13 = vsyncpa [#allocation9], 0
    %14 = vsyncpa [#allocation12], 0
    %15 = vsyncpa [#allocation15], 0
    %16 = vsyncpa [#allocation10], 0
    // Predicated region
    $region2: #{tpu_custom_call.1} parent=1 // pred_check
      _
    $region3: #{tpu_custom_call.1} parent=1 // pred_check_branch
      %18 = sbr.rel (0) target = $region5
    $region4: #{tpu_custom_call.1} parent=1 // pred_region
      _
    $region5: #{tpu_custom_call.1} parent=1 // pred_fallthru
      _
    // Predicated region
    $region6: #{tpu_custom_call.1} parent=1 // pred_check
      _
    $region7: #{tpu_custom_call.1} parent=1 // pred_check_branch
      %20 = sbr.rel (0) target = $region9
    $region8: #{tpu_custom_call.1} parent=1 // pred_region
      %22 = vsyncadd [#allocation9], 0
      %s24 = sshll.u32 %s1, 4
      %s25 = int_to_ptr.hbm [resolvable:$true] %s24
      %s26 = sshll.u32 [#allocation8], 4
      %s27 = int_to_ptr.vmem [resolvable:$true] %s26
      %29 = dma.hbm_to_vmem [thread:$0]  %s25, 64, %s27, [#allocation9]
    $region9: #{tpu_custom_call.1} parent=1 // pred_fallthru
      _
    // Predicated region
    $region10: #{tpu_custom_call.1} parent=1 // pred_check
      _
    $region11: #{tpu_custom_call.1} parent=1 // pred_check_branch
      %31 = sbr.rel (0) target = $region13
    $region12: #{tpu_custom_call.1} parent=1 // pred_region
      %33 = vsyncadd [#allocation12], 0
      %s35 = sshll.u32 %s2, 4
      %s36 = int_to_ptr.hbm [resolvable:$true] %s35
      %s37 = sshll.u32 [#allocation11], 4
      %s38 = int_to_ptr.vmem [resolvable:$true] %s37
      %40 = dma.hbm_to_vmem [thread:$0]  %s36, 64, %s38, [#allocation12]
    $region13: #{tpu_custom_call.1} parent=1 // pred_fallthru
      _
    // Predicated region
    $region14: #{tpu_custom_call.1} parent=1 // pred_check
      _
    $region15: #{tpu_custom_call.1} parent=1 // pred_check_branch
      %42 = sbr.rel (0) target = $region17
    $region16: #{tpu_custom_call.1} parent=1 // pred_region
      %44 = vsyncadd [#allocation12], 0
      %s46 = sshll.u32 %s3, 4
      %s47 = int_to_ptr.hbm [resolvable:$true] %s46
      %s48 = sshll.u32 [#allocation13], 4
      %s49 = int_to_ptr.vmem [resolvable:$true] %s48
      %51 = dma.hbm_to_vmem [thread:$0]  %s47, 64, %s49, [#allocation12]
    $region17: #{tpu_custom_call.1} parent=1 // pred_fallthru
      _
    // Predicated region
    $region18: #{tpu_custom_call.1} parent=1 // pred_check
      _
    $region19: #{tpu_custom_call.1} parent=1 // pred_check_branch
      %53 = sbr.rel (0) target = $region21
    $region20: #{tpu_custom_call.1} parent=1 // pred_region
      _
    $region21: #{tpu_custom_call.1} parent=1 // pred_fallthru
      _
    // Predicated region
    $region22: #{tpu_custom_call.1} parent=1 // pred_check
      _
    $region23: #{tpu_custom_call.1} parent=1 // pred_check_branch
      %55 = sbr.rel (0) target = $region25
    $region24: #{tpu_custom_call.1} parent=1 // pred_region
      %57 = vsyncadd [#allocation15], 0
      %s59 = sshll.u32 %s5, 4
      %s60 = int_to_ptr.hbm [resolvable:$true] %s59
      %s61 = sshll.u32 [#allocation14], 4
      %s62 = int_to_ptr.vmem [resolvable:$true] %s61
      %64 = dma.hbm_to_vmem [thread:$0]  %s60, 64, %s62, [#allocation15]
    $region25: #{tpu_custom_call.1} parent=1 // pred_fallthru
      _
    // Predicated region
    $region26: #{tpu_custom_call.1} parent=1 // pred_check
      _
    $region27: #{tpu_custom_call.1} parent=1 // pred_check_branch
      %66 = sbr.rel (0) target = $region29
    $region28: #{tpu_custom_call.1} parent=1 // pred_region
      %68 = vsyncadd [#allocation15], 0
      %s70 = sshll.u32 %s6, 4
      %s71 = int_to_ptr.hbm [resolvable:$true] %s70
      %s72 = sshll.u32 [#allocation16], 4
      %s73 = int_to_ptr.vmem [resolvable:$true] %s72
      %75 = dma.hbm_to_vmem [thread:$0]  %s71, 64, %s73, [#allocation15]
    $region29: #{tpu_custom_call.1} parent=1 // pred_fallthru
      _
    // Predicated region
    $region30: #{tpu_custom_call.1} parent=1 // pred_check
      _
    $region31: #{tpu_custom_call.1} parent=1 // pred_check_branch
      %77 = sbr.rel (0) target = $region33
    $region32: #{tpu_custom_call.1} parent=1 // pred_region
      _
    $region33: #{tpu_custom_call.1} parent=1 // pred_fallthru
      _
    // Predicated region
    $region34: #{tpu_custom_call.1} parent=1 // pred_check
      _
    $region35: #{tpu_custom_call.1} parent=1 // pred_check_branch
      %79 = sbr.rel (0) target = $region37
    $region36: #{tpu_custom_call.1} parent=1 // pred_region
      %81 = dma.done [#allocation9], 64
    $region37: #{tpu_custom_call.1} parent=1 // pred_fallthru
      _
    // Predicated region
    $region38: #{tpu_custom_call.1} parent=1 // pred_check
      _
    $region39: #{tpu_custom_call.1} parent=1 // pred_check_branch
      %83 = sbr.rel (0) target = $region41
    $region40: #{tpu_custom_call.1} parent=1 // pred_region
      %85 = dma.done [#allocation12], 64
    $region41: #{tpu_custom_call.1} parent=1 // pred_fallthru
      _
    // Predicated region
    $region42: #{tpu_custom_call.1} parent=1 // pred_check
      _
    $region43: #{tpu_custom_call.1} parent=1 // pred_check_branch
      %87 = sbr.rel (0) target = $region45
    $region44: #{tpu_custom_call.1} parent=1 // pred_region
      %89 = dma.done [#allocation12], 64
    $region45: #{tpu_custom_call.1} parent=1 // pred_fallthru
      _
    // Predicated region
    $region46: #{tpu_custom_call.1} parent=1 // pred_check
      _
    $region47: #{tpu_custom_call.1} parent=1 // pred_check_branch
      %91 = sbr.rel (0) target = $region49
    $region48: #{tpu_custom_call.1} parent=1 // pred_region
      %93 = dma.done [#allocation15], 64
    $region49: #{tpu_custom_call.1} parent=1 // pred_fallthru
      _
    // Predicated region
    $region50: #{tpu_custom_call.1} parent=1 // pred_check
      _
    $region51: #{tpu_custom_call.1} parent=1 // pred_check_branch
      %95 = sbr.rel (0) target = $region53
    $region52: #{tpu_custom_call.1} parent=1 // pred_region
      %97 = dma.done [#allocation15], 64
    $region53: #{tpu_custom_call.1} parent=1 // pred_fallthru
      _
    %s98 = smul.u32 0, 4
    %p99 = scmp.eq.s32.totalorder 0, 0
    // Predicated region
    $region54: #{tpu_custom_call.1} parent=1 // pred_check
      %p100 = pneg %p99
    $region55: #{tpu_custom_call.1} parent=1 // pred_check_branch
      %102 = sbr.rel (%p100) target = $region57
    $region56: #{tpu_custom_call.1} parent=1 // pred_region
      %v103 = vld [vmem:[%s0] sm:$0xf]
      %v104 = vmul.f32 %v103, %v103
      %vm105 = vcmask 1043456
      %v106 = vsel %vm105, %v104, 0.0
      %107 = vadd.xlane.f32.xlu0 %v106
      %v108 = vpop.xlane.xlu0 %107
      %v109 = vmax.f32 %v108, 1e-24
      %v110 = vrsqrt.pop %v109
      %v111 = vmul.f32 %v110, %v109
      %v112 = vmul.f32 %v111, %v110
      %v113 = vmul.f32 0.5, %v112
      %v114 = vsub.f32 1.5, %v113
      %v115 = vmul.f32 %v110, %v114
      %vm116 = vweird.f32 %v109
      %vm117 = vweird.f32 %v110
      %vm118 = vmor %vm116, %vm117
      %v119 = vsel %vm118, %v110, %v115
      %v120 = vmul.f32 %v103, %v119
      %121 = vst [vmem:[#allocation2] sm:$0xf] %v120
      %v122 = vld [vmem:[#allocation8] sm:$0xf]
      %v123 = vmul.f32 %v122, %v122
      %v124 = vsel %vm105, %v123, 0.0
      %125 = vadd.xlane.f32.xlu0 %v124
      %v126 = vpop.xlane.xlu0 %125
      %v127 = vmax.f32 %v126, 1e-24
      %v128 = vrsqrt.pop %v127
      %v129 = vmul.f32 %v128, %v127
      %v130 = vmul.f32 %v129, %v128
      %v131 = vmul.f32 0.5, %v130
      %v132 = vsub.f32 1.5, %v131
      %v133 = vmul.f32 %v128, %v132
      %vm134 = vweird.f32 %v127
      %vm135 = vweird.f32 %v128
      %vm136 = vmor %vm134, %vm135
      %v137 = vsel %vm136, %v128, %v133
      %v138 = vmul.f32 %v122, %v137
      %139 = vst [vmem:[#allocation3] sm:$0xf] %v138
      %v140 = vld [vmem:[#allocation11] sm:$0xf]
      %v141 = vmul.f32 %v140, %v140
      %v142 = vsel %vm105, %v141, 0.0
      %143 = vadd.xlane.f32.xlu0 %v142
      %v144 = vpop.xlane.xlu0 %143
      %v145 = vmax.f32 %v144, 1e-24
      %v146 = vrsqrt.pop %v145
      %v147 = vmul.f32 %v146, %v145
      %v148 = vmul.f32 %v147, %v146
      %v149 = vmul.f32 0.5, %v148
      %v150 = vsub.f32 1.5, %v149
      %v151 = vmul.f32 %v146, %v150
      %vm152 = vweird.f32 %v145
      %vm153 = vweird.f32 %v146
      %vm154 = vmor %vm152, %vm153
      %v155 = vsel %vm154, %v146, %v151
      %v156 = vmul.f32 %v140, %v155
      %157 = vst [vmem:[#allocation4] sm:$0xf] %v156
      %vm158 = vcmask 24576
      %159 = vst.msk [vmem:[#allocation6] sm:$0x1] %vm158, 0.0
      %vm160 = vcmask 0
      %161 = vst.msk [vmem:[#allocation7] sm:$0x1] %vm160, 0.0
    $region57: #{tpu_custom_call.1} parent=1 // pred_fallthru
      _
    %s162 = scalar_lea.vmem [#allocation2], %s98
    %v163 = vld [vmem:[%s162] sm:$0xf]
    %s164 = scalar_lea.vmem [#allocation3], %s98
    %v165 = vld [vmem:[%s164] sm:$0xf]
    %s166 = scalar_lea.vmem [#allocation4], %s98
    %v167 = vld [vmem:[%s166] sm:$0xf]
    %v168 = vld [vmem:[#allocation2] sm:$0xf]
    %169 = vmatpush.xpose.msra.mxu0 0.0
    %170 = vmatpush.xpose.msra.mxu0 0.0
    %171 = vmatpush.xpose.msra.mxu0 0.0
    %172 = vmatpush.xpose.msra.mxu0 0.0
    %173 = vmatpush.xpose.msra.mxu0 0.0
    %174 = vmatpush.xpose.msra.mxu0 0.0
    %175 = vmatpush.xpose.msra.mxu0 0.0
    %176 = vmatpush.xpose.msra.mxu0 0.0
    %177 = vmatpush.xpose.msra.mxu0 0.0
    %178 = vmatpush.xpose.msra.mxu0 0.0
    %179 = vmatpush.xpose.msra.mxu0 0.0
    %180 = vmatpush.xpose.msra.mxu0 0.0
    %181 = vmatpush.xpose.msra.mxu0 0.0
    %182 = vmatpush.xpose.msra.mxu0 0.0
    %183 = vmatpush.xpose.msra.mxu0 0.0
    %184 = vmatpush.xpose.msra.mxu0 %v168
    %185 = vmatmul.f32.gmra.mxu0 %v163
    %v186 = vpop.f32.mrf.mxu0
    %v187 = vadd.f32 0.0, %v186
    %188 = vdwg.mxu0
    %vm189 = vcmp.eq.f32.partialorder %v187, 0.0
    %v190 = vsel %vm189, 0.0, 0.5
    %v191 = vmul.f32 %v187, %v190
    %v192 = vadd.f32 %v191, 0.0
    %v193 = vadd.f32 %v190, 0.0
    %v194 = vld [vmem:[#allocation3] sm:$0xf]
    %195 = vmatpush.xpose.msra.mxu0 0.0
    %196 = vmatpush.xpose.msra.mxu0 0.0
    %197 = vmatpush.xpose.msra.mxu0 0.0
    %198 = vmatpush.xpose.msra.mxu0 0.0
    %199 = vmatpush.xpose.msra.mxu0 0.0
    %200 = vmatpush.xpose.msra.mxu0 0.0
    %201 = vmatpush.xpose.msra.mxu0 0.0
    %202 = vmatpush.xpose.msra.mxu0 0.0
    %203 = vmatpush.xpose.msra.mxu0 0.0
    %204 = vmatpush.xpose.msra.mxu0 0.0
    %205 = vmatpush.xpose.msra.mxu0 0.0
    %206 = vmatpush.xpose.msra.mxu0 0.0
    %207 = vmatpush.xpose.msra.mxu0 0.0
    %208 = vmatpush.xpose.msra.mxu0 0.0
    %209 = vmatpush.xpose.msra.mxu0 0.0
    %210 = vmatpush.xpose.msra.mxu0 %v194
    %211 = vmatmul.f32.gmra.mxu0 %v165
    %v212 = vpop.f32.mrf.mxu0
    %v213 = vadd.f32 0.0, %v212
    %214 = vdwg.mxu0
    %vm215 = vcmp.eq.f32.partialorder %v213, 0.0
    %v216 = vsel %vm215, 0.0, 0.3
    %v217 = vmul.f32 %v213, %v216
    %v218 = vadd.f32 %v192, %v217
    %v219 = vadd.f32 %v193, %v216
    %v220 = vld [vmem:[#allocation4] sm:$0xf]
    %221 = vmatpush.xpose.msra.mxu0 0.0
    %222 = vmatpush.xpose.msra.mxu0 0.0
    %223 = vmatpush.xpose.msra.mxu0 0.0
    %224 = vmatpush.xpose.msra.mxu0 0.0
    %225 = vmatpush.xpose.msra.mxu0 0.0
    %226 = vmatpush.xpose.msra.mxu0 0.0
    %227 = vmatpush.xpose.msra.mxu0 0.0
    %228 = vmatpush.xpose.msra.mxu0 0.0
    %229 = vmatpush.xpose.msra.mxu0 0.0
    %230 = vmatpush.xpose.msra.mxu0 0.0
    %231 = vmatpush.xpose.msra.mxu0 0.0
    %232 = vmatpush.xpose.msra.mxu0 0.0
    %233 = vmatpush.xpose.msra.mxu0 0.0
    %234 = vmatpush.xpose.msra.mxu0 0.0
    %235 = vmatpush.xpose.msra.mxu0 0.0
    %236 = vmatpush.xpose.msra.mxu0 %v220
    %237 = vmatmul.f32.gmra.mxu0 %v167
    %v238 = vpop.f32.mrf.mxu0
    %v239 = vadd.f32 0.0, %v238
    %240 = vdwg.mxu0
    %vm241 = vcmp.eq.f32.partialorder %v239, 0.0
    %v242 = vsel %vm241, 0.0, 0.2
    %v243 = vmul.f32 %v239, %v242
    %v244 = vadd.f32 %v218, %v243
    %v245 = vadd.f32 %v219, %v242
    %v246 = vadd.f32 %v245, 1e-12
    %v247 = vrcp.pop %v246
    %v248 = vmul.f32 %v244, %v247
    %v249 = vmul.f32 %v248, 2.0
    %v250 = vmul.f32 %v249, 1.442695
    %v251 = vpow.pop %v250
    %v252 = vlaneseq
    %v253 = vshrl.u32 %v252, 7
    %v254 = vstv %s98
    %v255 = vadd.s32 %v254, %v253
    %v256 = vlaneseq
    %v257 = vand.u32 %v256, 127
    %v258 = vsub.s32 %v255, %v257
    %vm259 = vcmp.lt.s32.totalorder %v258, 0
    %v260 = vsub.s32 0, %v258
    %v261 = vsel %vm259, %v260, %v258
    %vm262 = vcmp.eq.s32.totalorder %v261, 2
    %vm263 = vcmp.ne.s32.totalorder %v261, 0
    %vm264 = vcmp.ne.s32.totalorder %v261, 2
    %vm265 = vmand %vm263, %vm264
    %v266 = vsel %vm262, %v251, 0.0
    %vm267 = vcmask 27648
    %v268 = vsel %vm267, %v266, 0.0
    %269 = vadd.xlane.f32.xlu0 %v268
    %v270 = vpop.xlane.xlu0 %269
    %s271 = scalar_lea.vmem [#allocation5], %s98
    %vm272 = vcmask 3072
    %273 = vst.msk [vmem:[%s271] sm:$0xf] %vm272, %v270
    %v274 = vld [vmem:[#allocation6] sm:$0x1]
    %v275 = vsel %vm265, %v251, 0.0
    %v276 = vsel %vm267, %v275, 0.0
    %v277 = vrot.slane %v276, 4
    %v278 = vadd.f32 %v276, %v277
    %v279 = vrot.slane %v278, 2
    %v280 = vadd.f32 %v278, %v279
    %v281 = vrot.slane %v280, 1
    %v282 = vadd.f32 %v280, %v281
    %v283 = vadd.f32 %v274, %v282
    %vm284 = vcmask 24576
    %285 = vst.msk [vmem:[#allocation6] sm:$0x1] %vm284, %v283
    %v286 = vld [vmem:[#allocation16] sm:$0x7]
    %v287 = vld [vmem:[#allocation13] sm:$0xf]
    %288 = vmatpush.xpose.msra.mxu0 0.0
    %289 = vmatpush.xpose.msra.mxu0 0.0
    %290 = vmatpush.xpose.msra.mxu0 0.0
    %291 = vmatpush.xpose.msra.mxu0 0.0
    %292 = vmatpush.xpose.msra.mxu0 0.0
    %293 = vmatpush.xpose.msra.mxu0 0.0
    %294 = vmatpush.xpose.msra.mxu0 0.0
    %295 = vmatpush.xpose.msra.mxu0 0.0
    %296 = vmatpush.xpose.msra.mxu0 0.0
    %297 = vmatpush.xpose.msra.mxu0 0.0
    %298 = vmatpush.xpose.msra.mxu0 0.0
    %299 = vmatpush.xpose.msra.mxu0 0.0
    %300 = vmatpush.xpose.msra.mxu0 0.0
    %301 = vmatpush.xpose.msra.mxu0 0.0
    %302 = vmatpush.xpose.msra.mxu0 0.0
    %303 = vmatpush.xpose.msra.mxu0 %v287
    %304 = vmatmul.f32.gmra.mxu0 %v163
    %v305 = vpop.f32.mrf.mxu0
    %v306 = vadd.f32 0.0, %v305
    %307 = vdwg.mxu0
    %v308 = vadd.f32 %v286, 1e-12
    %v309 = vrcp.pop %v308
    %v310 = vperm.slane %v309, 0
    %v311 = vmul.f32 %v306, %v310
    %vm312 = vcmp.eq.f32.partialorder %v286, 0.0
    %vm313 = vcmp.eq.f32.partialorder %v311, 0.0
    %v314 = vsel %vm312, 1, 0
    %v315 = vperm.slane %v314, 0
    %vm316 = vcmp.eq.s32.totalorder %v315, 1
    %vm317 = vmor %vm316, %vm313
    %v318 = vsel %vm317, 0.0, 0.5
    %v319 = vmul.f32 %v311, %v318
    %v320 = vadd.f32 %v319, 0.0
    %v321 = vadd.f32 %v318, 0.0
    %v322 = vld [vmem:[%s4] sm:$0xf]
    %323 = vmatpush.xpose.msra.mxu0 0.0
    %324 = vmatpush.xpose.msra.mxu0 0.0
    %325 = vmatpush.xpose.msra.mxu0 0.0
    %326 = vmatpush.xpose.msra.mxu0 0.0
    %327 = vmatpush.xpose.msra.mxu0 0.0
    %328 = vmatpush.xpose.msra.mxu0 0.0
    %329 = vmatpush.xpose.msra.mxu0 0.0
    %330 = vmatpush.xpose.msra.mxu0 0.0
    %331 = vmatpush.xpose.msra.mxu0 0.0
    %332 = vmatpush.xpose.msra.mxu0 0.0
    %333 = vmatpush.xpose.msra.mxu0 0.0
    %334 = vmatpush.xpose.msra.mxu0 0.0
    %335 = vmatpush.xpose.msra.mxu0 0.0
    %336 = vmatpush.xpose.msra.mxu0 0.0
    %337 = vmatpush.xpose.msra.mxu0 0.0
    %338 = vmatpush.xpose.msra.mxu0 %v322
    %339 = vmatmul.f32.gmra.mxu0 %v165
    %v340 = vpop.f32.mrf.mxu0
    %v341 = vadd.f32 0.0, %v340
    %342 = vdwg.mxu0
    %v343 = vperm.slane %v309, 1
    %v344 = vmul.f32 %v341, %v343
    %vm345 = vcmp.eq.f32.partialorder %v344, 0.0
    %v346 = vperm.slane %v314, 1
    %vm347 = vcmp.eq.s32.totalorder %v346, 1
    %vm348 = vmor %vm347, %vm345
    %v349 = vsel %vm348, 0.0, 0.3
    %v350 = vmul.f32 %v344, %v349
    %v351 = vadd.f32 %v320, %v350
    %v352 = vadd.f32 %v321, %v349
    %v353 = vld [vmem:[#allocation14] sm:$0xf]
    %354 = vmatpush.xpose.msra.mxu0 0.0
    %355 = vmatpush.xpose.msra.mxu0 0.0
    %356 = vmatpush.xpose.msra.mxu0 0.0
    %357 = vmatpush.xpose.msra.mxu0 0.0
    %358 = vmatpush.xpose.msra.mxu0 0.0
    %359 = vmatpush.xpose.msra.mxu0 0.0
    %360 = vmatpush.xpose.msra.mxu0 0.0
    %361 = vmatpush.xpose.msra.mxu0 0.0
    %362 = vmatpush.xpose.msra.mxu0 0.0
    %363 = vmatpush.xpose.msra.mxu0 0.0
    %364 = vmatpush.xpose.msra.mxu0 0.0
    %365 = vmatpush.xpose.msra.mxu0 0.0
    %366 = vmatpush.xpose.msra.mxu0 0.0
    %367 = vmatpush.xpose.msra.mxu0 0.0
    %368 = vmatpush.xpose.msra.mxu0 0.0
    %369 = vmatpush.xpose.msra.mxu0 %v353
    %370 = vmatmul.f32.gmra.mxu0 %v167
    %v371 = vpop.f32.mrf.mxu0
    %v372 = vadd.f32 0.0, %v371
    %373 = vdwg.mxu0
    %v374 = vperm.slane %v309, 2
    %v375 = vmul.f32 %v372, %v374
    %vm376 = vcmp.eq.f32.partialorder %v375, 0.0
    %v377 = vperm.slane %v314, 2
    %vm378 = vcmp.eq.s32.totalorder %v377, 1
    %vm379 = vmor %vm378, %vm376
    %v380 = vsel %vm379, 0.0, 0.2
    %v381 = vmul.f32 %v375, %v380
    %v382 = vadd.f32 %v351, %v381
    %v383 = vadd.f32 %v352, %v380
    %v384 = vadd.f32 %v383, 1e-12
    %v385 = vrcp.pop %v384
    %v386 = vmul.f32 %v382, %v385
    %s387 = scalar_lea.vmem %s7, %s98
    %v388 = vld [vmem:[%s387] sm:$0xf]
    %389 = vset.pattern.permute.xlu0 0
    %390 = vperm.xlu0 %389, %v388
    %v391 = vpop.permute.xlu0 %390
    %vm392 = vcmp.eq.s32.totalorder %v257, %v391
    %v393 = vsel %vm392, %v386, 0.0
    %v394 = vsel %vm267, %v393, 0.0
    %395 = vadd.xlane.f32.xlu0 %v394
    %v396 = vpop.xlane.xlu0 %395
    %v397 = vsel %vm267, %v386, -inf
    %398 = vmax.xlane.f32.xlu0 %v397
    %v399 = vpop.xlane.xlu0 %398
    %v400 = vsub.f32 %v386, %v399
    %v401 = vmul.f32 %v400, 1.442695
    %v402 = vpow.pop %v401
    %v403 = vsel %vm267, %v402, 0.0
    %404 = vadd.xlane.f32.xlu0 %v403
    %v405 = vpop.xlane.xlu0 %404
    %v406 = vlog2.pop %v405
    %v407 = vmul.f32 %v406, 0.6931472
    %v408 = vadd.f32 %v399, %v407
    %v409 = vld [vmem:[#allocation7] sm:$0x1]
    %v410 = vsub.f32 %v408, %v396
    %vm411 = vcmask 1043456
    %v412 = vsel %vm411, %v410, 0.0
    %v413 = vrot.slane %v412, 4
    %v414 = vadd.f32 %v412, %v413
    %v415 = vrot.slane %v414, 2
    %v416 = vadd.f32 %v414, %v415
    %v417 = vrot.slane %v416, 1
    %v418 = vadd.f32 %v416, %v417
    %v419 = vadd.f32 %v409, %v418
    %vm420 = vcmask 0
    %421 = vst.msk [vmem:[#allocation7] sm:$0x1] %vm420, %v419
    // Predicated region
    $region58: #{tpu_custom_call.1} parent=1 // pred_check
      %p422 = pneg %p99
    $region59: #{tpu_custom_call.1} parent=1 // pred_check_branch
      %424 = sbr.rel (%p422) target = $region61
    $region60: #{tpu_custom_call.1} parent=1 // pred_region
      %v425 = vld [vmem:[#allocation6] sm:$0x1]
      %v426 = vld [vmem:[#allocation5] sm:$0xf]
      %428 = vset.pattern.permute.xlu0 0
      %429 = vperm.xlu0 %428, %v426
      %v430 = vpop.permute.xlu0 %429
      %v433 = vperm.slane %v425, 0
      %v435 = vadd.f32 %v430, %v433
      %v436 = vlog2.pop %v435
      %v437 = vmul.f32 %v436, 0.6931472
      %v438 = vsel %vm267, %v437, 0.0
      %439 = vadd.xlane.f32.xlu0 %v438
      %v440 = vpop.xlane.xlu0 %439
      %v441 = vrot.slane %v440, 4
      %v442 = vadd.f32 %v440, %v441
      %v443 = vrot.slane %v442, 2
      %v444 = vadd.f32 %v442, %v443
      %v445 = vrot.slane %v444, 1
      %v446 = vadd.f32 %v444, %v445
      %s447 = vtos %v446
      %v448 = vstv %s447
      %v449 = vlog2.pop %v426
      %v450 = vmul.f32 %v449, 0.6931472
      %v451 = vsel %vm272, %v450, 0.0
      %452 = vadd.xlane.f32.xlu0 %v451
      %v453 = vpop.xlane.xlu0 %452
      %v454 = vrot.slane %v453, 4
      %v455 = vadd.f32 %v453, %v454
      %v456 = vrot.slane %v455, 2
      %v457 = vadd.f32 %v455, %v456
      %v458 = vrot.slane %v457, 1
      %v459 = vadd.f32 %v457, %v458
      %s460 = vtos %v459
      %v461 = vstv %s460
      %v462 = vmul.f32 %v448, 0.0625
      %v463 = vmul.f32 %v461, 0.25
      %v464 = vsub.f32 %v462, %v463
      %v465 = vld [vmem:[#allocation7] sm:$0x1]
      %v466 = vmul.f32 %v465, 0.25
      %v467 = vadd.f32 %v464, %v466
      %468 = vst.msk [vmem:[#allocation17] sm:$0x1] %vm420, %v467
    $region61: #{tpu_custom_call.1} parent=1 // pred_fallthru
      _
    // Predicated region
    $region62: #{tpu_custom_call.1} parent=1 // pred_check
      _
    $region63: #{tpu_custom_call.1} parent=1 // pred_check_branch
      %470 = sbr.rel (0) target = $region65
    $region64: #{tpu_custom_call.1} parent=1 // pred_region
      %472 = vsyncadd [#allocation10], 0
      %s474 = sshll.u32 [#allocation17], 4
      %s475 = int_to_ptr.vmem [resolvable:$true] %s474
      %s476 = sshll.u32 %s8, 4
      %s477 = int_to_ptr.hbm [resolvable:$true] %s476
      %479 = dma.vmem_to_hbm [thread:$0]  %s475, 16, %s477, [#allocation10]
    $region65: #{tpu_custom_call.1} parent=1 // pred_fallthru
      _
    // Predicated region
    $region66: #{tpu_custom_call.1} parent=1 // pred_check
      _
    $region67: #{tpu_custom_call.1} parent=1 // pred_check_branch
      %481 = sbr.rel (0) target = $region69
    $region68: #{tpu_custom_call.1} parent=1 // pred_region
      %483 = dma.done [#allocation10], 16
    $region69: #{tpu_custom_call.1} parent=1 // pred_fallthru
      _
    %484 = vsyncpa [#allocation9], 1
    %485 = vsyncpa [#allocation12], 1
    %486 = vsyncpa [#allocation15], 1
    %487 = vsyncpa [#allocation10], 1

</llo_original>
